<compile_context>
chip_gen: v5e
topology: v5e:2x2
jax: 0.10.0
libtpu: 0.0.40
codegen_flags: <defaults>
</compile_context>

<pallas_src>
import jax
import jax.numpy as jnp
from jax import lax
from jax.experimental import pallas as pl
from jax.experimental.pallas import tpu as pltpu


# ---------------------------------------------------------------------------
# Fused kernel: Bblk batch elements per grid step, everything resident in VMEM.
# ---------------------------------------------------------------------------

def _residual1d_kernel(x_ref, w1_ref, b1_ref, w2_ref, b2_ref, o_ref):
    """x_ref/o_ref: (Bblk, C, L) NCL f32; w*_ref: (C, 3C) bf16 = [W0|W1|W2]; b*_ref: (1, C) f32."""
    Bblk, C, L = x_ref.shape
    M = Bblk * L

    # NCL -> row-stacked (M, C): per-sample 2D transpose (XLU) stacked along sublanes.
    x_mc = jnp.concatenate([x_ref[i].T for i in range(Bblk)],
                           axis=0).astype(jnp.float32)               # (M, C) f32

    # Per-sample boundary masks for the shifted conv taps (built once, shared by both convs).
    row = lax.broadcasted_iota(jnp.int32, (M, 1), 0)
    tpos = row % L
    keep_prev = (tpos != 0).astype(jnp.float32)       # zero the (wrapped) t == 0 row of each sample
    keep_next = (tpos != L - 1).astype(jnp.float32)   # zero the (wrapped) t == L-1 row of each sample

    def conv3_of_tanh(v, wcat_ref, b_ref):
        # tanh (f32, EUP/VPU) -> bf16 -> one MXU dot with K=C, N=3C (f32 accumulate),
        # then combine the three taps via +/-1 row shifts + boundary masks (no im2col window).
        t = jnp.tanh(v).astype(jnp.bfloat16)
        y = jnp.dot(t, wcat_ref[...], preferred_element_type=jnp.float32)  # (M, 3C) f32
        y_prev = y[:, 0:C]            # tanh(v) @ W0 : contributes to output row t+1
        y_ctr = y[:, C:2 * C]         # tanh(v) @ W1 : output row t
        y_next = y[:, 2 * C:3 * C]    # tanh(v) @ W2 : contributes to output row t-1
        down = jnp.roll(y_prev, 1, axis=0) * keep_prev    # y_prev[t-1], zeroed at sample starts
        up = jnp.roll(y_next, -1, axis=0) * keep_next     # y_next[t+1], zeroed at sample ends
        return y_ctr + down + up + b_ref[...]

    h = conv3_of_tanh(x_mc, w1_ref, b1_ref)
    h = conv3_of_tanh(h, w2_ref, b2_ref)
    out = x_mc + h                                        # residual add, (M, C) f32

    # (M, C) -> NCL store, per-sample transpose back (XLU).
    for i in range(Bblk):
        o_ref[i] = out[i * L:(i + 1) * L].T.astype(o_ref.dtype)


def _pick_block_batch(B, L, target_rows=512, max_rows=2048):
    """Largest divisor of B whose block has <= max_rows rows; stop once M >= target_rows."""
    best = 1
    for d in range(1, B + 1):
        if B % d == 0 and d * L <= max_rows:
            best = d
            if d * L >= target_rows:
                break
    return best


def residual1d(x_ncl, w1_kcc, b1, w2_kcc, b2):
    """PyTorch-layout Residual1d: x (B, C, L) -> (B, C, L).

    w*_kcc: (3, Cin, Cout) = torch Conv1d weight permuted (2, 1, 0); b*: (Cout,).
    The NCL<->row-major swaps are done on-chip inside the kernel (no wrapper transposes).
    """
    B, C, L = x_ncl.shape
    bblk = _pick_block_batch(B, L)          # raise matmul M = bblk*L; 1 grid step at tiny shapes
    grid = (B // bblk,)

    w1cat = jnp.concatenate([w1_kcc[0], w1_kcc[1], w1_kcc[2]], axis=1).astype(jnp.bfloat16)  # (C, 3C)
    w2cat = jnp.concatenate([w2_kcc[0], w2_kcc[1], w2_kcc[2]], axis=1).astype(jnp.bfloat16)
    b1r = b1.reshape(1, C).astype(jnp.float32)
    b2r = b2.reshape(1, C).astype(jnp.float32)

    grid_spec = pltpu.PrefetchScalarGridSpec(
        num_scalar_prefetch=0,
        grid=grid,
        in_specs=[
            pl.BlockSpec((bblk, C, L), lambda g: (g, 0, 0)),
            pl.BlockSpec((C, 3 * C), lambda g: (0, 0)),
            pl.BlockSpec((1, C), lambda g: (0, 0)),
            pl.BlockSpec((C, 3 * C), lambda g: (0, 0)),
            pl.BlockSpec((1, C), lambda g: (0, 0)),
        ],
        out_specs=pl.BlockSpec((bblk, C, L), lambda g: (g, 0, 0)),
    )
    return pl.pallas_call(
        _residual1d_kernel,
        out_shape=jax.ShapeDtypeStruct((B, C, L), x_ncl.dtype),
        grid_spec=grid_spec,
        compiler_params=pltpu.CompilerParams(
            # Default scoped VMEM limit suffices for these block sizes (do not pin 64 MiB on v7x).
            dimension_semantics=("parallel",),   # shard batch blocks across TCs when grid > 1
        ),
    )(x_ncl, w1cat, b1r, w2cat, b2r)


# ---------------------------------------------------------------------------
# Pure-JAX reference (f32, independent formulation) for correctness checking.
# ---------------------------------------------------------------------------

def _residual1d_ref(x_ncl, w1_kcc, b1, w2_kcc, b2):
    x = jnp.transpose(x_ncl, (0, 2, 1)).astype(jnp.float32)          # (B, L, C)

    def conv3(v, w, b):
        L = v.shape[1]
        vp = jnp.pad(jnp.tanh(v), ((0, 0), (1, 1), (0, 0)))
        return sum(jnp.einsum("blc,cd->bld", vp[:, k:k + L], w[k]) for k in range(3)) + b

    h = conv3(x, w1_kcc, b1)
    h = conv3(h, w2_kcc, b2)
    return jnp.transpose(x + h, (0, 2, 1))


# ---------------------------------------------------------------------------

if __name__ == "__main__":
    # Small shapes consistent with the module's use in the text model:
    # batch=2, num_channels=128, length=16 (PyTorch NCL input).
    B, C, L = 2, 128, 16

    key = jax.random.PRNGKey(0)
    kx, k1, k2, k3, k4 = jax.random.split(key, 5)
    x = jax.random.normal(kx, (B, C, L), jnp.float32)
    w1 = 0.02 * jax.random.normal(k1, (3, C, C), jnp.float32)
    b1 = 0.02 * jax.random.normal(k2, (C,), jnp.float32)
    w2 = 0.02 * jax.random.normal(k3, (3, C, C), jnp.float32)
    b2 = 0.02 * jax.random.normal(k4, (C,), jnp.float32)

    fwd = jax.jit(residual1d)
    out = fwd(x, w1, b1, w2, b2)
    jax.block_until_ready(out)

    assert out.shape == (B, C, L), out.shape
    assert out.dtype == jnp.float32

    ref = _residual1d_ref(x, w1, b1, w2, b2)
    max_err = float(jnp.max(jnp.abs(out - ref)))
    # bf16 matmul operands vs f32 reference -> loose tolerance.
    assert jnp.allclose(out, ref, atol=2e-2, rtol=2e-2), max_err

    print("KERNEL_OK")
</pallas_src>

<mosaic_0001>
module attributes {stable_mosaic.version = 11 : i64} {
  func.func @_residual1d_kernel(%arg0: i32, %arg1: memref<2x128x16xf32, #tpu.memory_space<vmem>>, %arg2: memref<128x384xbf16, #tpu.memory_space<vmem>>, %arg3: memref<1x128xf32, #tpu.memory_space<vmem>>, %arg4: memref<128x384xbf16, #tpu.memory_space<vmem>>, %arg5: memref<1x128xf32, #tpu.memory_space<vmem>>, %arg6: memref<2x128x16xf32, #tpu.memory_space<vmem>>) attributes {dimension_semantics = [#tpu.dimension_semantics<parallel>], iteration_bounds = array<i64: 1>, scalar_prefetch = 0 : i64, scratch_operands = 0 : i64, tpu.core_type = #tpu.core_type<tc>, window_params = [{transform_indices = @transform_0, window_bounds = array<i64: 2, 128, 16>}, {pipeline_mode = #tpu.pipeline_mode<synchronous>, transform_indices = @transform_1, window_bounds = array<i64: 128, 384>}, {pipeline_mode = #tpu.pipeline_mode<synchronous>, transform_indices = @transform_2, window_bounds = array<i64: 1, 128>}, {pipeline_mode = #tpu.pipeline_mode<synchronous>, transform_indices = @transform_3, window_bounds = array<i64: 128, 384>}, {pipeline_mode = #tpu.pipeline_mode<synchronous>, transform_indices = @transform_4, window_bounds = array<i64: 1, 128>}, {transform_indices = @transform_5, window_bounds = array<i64: 2, 128, 16>}]} {
    %c0 = arith.constant 0 : index
    %c0_0 = arith.constant 0 : index
    %c0_1 = arith.constant 0 : index
    %0 = vector.load %arg1[%c0, %c0_0, %c0_1] : memref<2x128x16xf32, #tpu.memory_space<vmem>>, vector<1x128x16xf32>
    %1 = vector.shape_cast %0 : vector<1x128x16xf32> to vector<128x16xf32>
    %2 = tpu.transpose %1, [1, 0] : vector<128x16xf32> -> vector<16x128xf32>
    %c1 = arith.constant 1 : index
    %c0_2 = arith.constant 0 : index
    %c0_3 = arith.constant 0 : index
    %3 = vector.load %arg1[%c1, %c0_2, %c0_3] : memref<2x128x16xf32, #tpu.memory_space<vmem>>, vector<1x128x16xf32>
    %4 = vector.shape_cast %3 : vector<1x128x16xf32> to vector<128x16xf32>
    %5 = tpu.transpose %4, [1, 0] : vector<128x16xf32> -> vector<16x128xf32>
    %6 = tpu.concatenate %2, %5 in 0 : vector<16x128xf32>, vector<16x128xf32> -> vector<32x128xf32>
    %7 = tpu.iota {dimensions = array<i32: 0>} : vector<32x1xi32>
    %c16_i32 = arith.constant 16 : i32
    %c0_i32 = arith.constant 0 : i32
    %8 = arith.cmpi eq, %c16_i32, %c0_i32 : i32
    %c1_i32 = arith.constant 1 : i32
    %9 = arith.select %8, %c1_i32, %c16_i32 : i32
    %10 = vector.broadcast %9 : i32 to vector<32x1xi32>
    %11 = arith.remsi %7, %10 : vector<32x1xi32>
    %c0_i32_4 = arith.constant 0 : i32
    %12 = vector.broadcast %c0_i32_4 : i32 to vector<32x1xi32>
    %13 = arith.cmpi ne, %11, %12 : vector<32x1xi32>
    %c0_i32_5 = arith.constant 0 : i32
    %14 = vector.broadcast %c0_i32_5 : i32 to vector<32x1xi32>
    %15 = arith.cmpi slt, %11, %14 : vector<32x1xi32>
    %c0_i32_6 = arith.constant 0 : i32
    %16 = arith.cmpi slt, %9, %c0_i32_6 : i32
    %17 = vector.broadcast %16 : i1 to vector<32x1xi1>
    %18 = vector.broadcast %17 : vector<32x1xi1> to vector<32x1xi1>
    %19 = arith.xori %15, %18 : vector<32x1xi1>
    %20 = arith.andi %19, %13 : vector<32x1xi1>
    %21 = vector.broadcast %9 : i32 to vector<32x1xi32>
    %22 = arith.addi %11, %21 : vector<32x1xi32>
    %23 = arith.select %20, %22, %11 : vector<32x1xi1>, vector<32x1xi32>
    %c0_i32_7 = arith.constant 0 : i32
    %24 = vector.broadcast %c0_i32_7 : i32 to vector<32x1xi32>
    %25 = arith.cmpi ne, %23, %24 : vector<32x1xi32>
    %26 = arith.extui %25 : vector<32x1xi1> to vector<32x1xi32>
    %27 = arith.sitofp %26 : vector<32x1xi32> to vector<32x1xf32>
    %c15_i32 = arith.constant 15 : i32
    %28 = vector.broadcast %c15_i32 : i32 to vector<32x1xi32>
    %29 = arith.cmpi ne, %23, %28 : vector<32x1xi32>
    %30 = arith.extui %29 : vector<32x1xi1> to vector<32x1xi32>
    %31 = arith.sitofp %30 : vector<32x1xi32> to vector<32x1xf32>
    %32 = math.tanh %6 : vector<32x128xf32>
    %33 = arith.truncf %32 : vector<32x128xf32> to vector<32x128xbf16>
    %c0_8 = arith.constant 0 : index
    %c0_9 = arith.constant 0 : index
    %34 = vector.load %arg2[%c0_8, %c0_9] : memref<128x384xbf16, #tpu.memory_space<vmem>>, vector<128x384xbf16>
    %cst = arith.constant dense<0.000000e+00> : vector<32x384xf32>
    %35 = tpu.matmul %33, %34, %cst {dimension_numbers = #tpu.dot_dimension_numbers<[1], [0], [0], [1], [0, 0, 1, 1], [], []>} : vector<32x128xbf16>, vector<128x384xbf16>, vector<32x384xf32> -> vector<32x384xf32>
    %36 = vector.extract_strided_slice %35 {offsets = [0, 0], sizes = [32, 128], strides = [1, 1]} : vector<32x384xf32> to vector<32x128xf32>
    %37 = vector.extract_strided_slice %35 {offsets = [0, 128], sizes = [32, 128], strides = [1, 1]} : vector<32x384xf32> to vector<32x128xf32>
    %38 = vector.extract_strided_slice %35 {offsets = [0, 256], sizes = [32, 128], strides = [1, 1]} : vector<32x384xf32> to vector<32x128xf32>
    %39 = vector.extract_strided_slice %36 {offsets = [31, 0], sizes = [1, 128], strides = [1, 1]} : vector<32x128xf32> to vector<1x128xf32>
    %40 = vector.extract_strided_slice %36 {offsets = [0, 0], sizes = [31, 128], strides = [1, 1]} : vector<32x128xf32> to vector<31x128xf32>
    %41 = tpu.concatenate %39, %40 in 0 : vector<1x128xf32>, vector<31x128xf32> -> vector<32x128xf32>
    %42 = vector.broadcast %27 : vector<32x1xf32> to vector<32x128xf32>
    %43 = arith.mulf %41, %42 : vector<32x128xf32>
    %44 = vector.extract_strided_slice %38 {offsets = [1, 0], sizes = [31, 128], strides = [1, 1]} : vector<32x128xf32> to vector<31x128xf32>
    %45 = vector.extract_strided_slice %38 {offsets = [0, 0], sizes = [1, 128], strides = [1, 1]} : vector<32x128xf32> to vector<1x128xf32>
    %46 = tpu.concatenate %44, %45 in 0 : vector<31x128xf32>, vector<1x128xf32> -> vector<32x128xf32>
    %47 = vector.broadcast %31 : vector<32x1xf32> to vector<32x128xf32>
    %48 = arith.mulf %46, %47 : vector<32x128xf32>
    %49 = arith.addf %37, %43 : vector<32x128xf32>
    %50 = arith.addf %49, %48 : vector<32x128xf32>
    %c0_10 = arith.constant 0 : index
    %c0_11 = arith.constant 0 : index
    %51 = vector.load %arg3[%c0_10, %c0_11] : memref<1x128xf32, #tpu.memory_space<vmem>>, vector<1x128xf32>
    %52 = vector.broadcast %51 : vector<1x128xf32> to vector<32x128xf32>
    %53 = arith.addf %50, %52 : vector<32x128xf32>
    %54 = math.tanh %53 : vector<32x128xf32>
    %55 = arith.truncf %54 : vector<32x128xf32> to vector<32x128xbf16>
    %c0_12 = arith.constant 0 : index
    %c0_13 = arith.constant 0 : index
    %56 = vector.load %arg4[%c0_12, %c0_13] : memref<128x384xbf16, #tpu.memory_space<vmem>>, vector<128x384xbf16>
    %cst_14 = arith.constant dense<0.000000e+00> : vector<32x384xf32>
    %57 = tpu.matmul %55, %56, %cst_14 {dimension_numbers = #tpu.dot_dimension_numbers<[1], [0], [0], [1], [0, 0, 1, 1], [], []>} : vector<32x128xbf16>, vector<128x384xbf16>, vector<32x384xf32> -> vector<32x384xf32>
    %58 = vector.extract_strided_slice %57 {offsets = [0, 0], sizes = [32, 128], strides = [1, 1]} : vector<32x384xf32> to vector<32x128xf32>
    %59 = vector.extract_strided_slice %57 {offsets = [0, 128], sizes = [32, 128], strides = [1, 1]} : vector<32x384xf32> to vector<32x128xf32>
    %60 = vector.extract_strided_slice %57 {offsets = [0, 256], sizes = [32, 128], strides = [1, 1]} : vector<32x384xf32> to vector<32x128xf32>
    %61 = vector.extract_strided_slice %58 {offsets = [31, 0], sizes = [1, 128], strides = [1, 1]} : vector<32x128xf32> to vector<1x128xf32>
    %62 = vector.extract_strided_slice %58 {offsets = [0, 0], sizes = [31, 128], strides = [1, 1]} : vector<32x128xf32> to vector<31x128xf32>
    %63 = tpu.concatenate %61, %62 in 0 : vector<1x128xf32>, vector<31x128xf32> -> vector<32x128xf32>
    %64 = vector.broadcast %27 : vector<32x1xf32> to vector<32x128xf32>
    %65 = arith.mulf %63, %64 : vector<32x128xf32>
    %66 = vector.extract_strided_slice %60 {offsets = [1, 0], sizes = [31, 128], strides = [1, 1]} : vector<32x128xf32> to vector<31x128xf32>
    %67 = vector.extract_strided_slice %60 {offsets = [0, 0], sizes = [1, 128], strides = [1, 1]} : vector<32x128xf32> to vector<1x128xf32>
    %68 = tpu.concatenate %66, %67 in 0 : vector<31x128xf32>, vector<1x128xf32> -> vector<32x128xf32>
    %69 = vector.broadcast %31 : vector<32x1xf32> to vector<32x128xf32>
    %70 = arith.mulf %68, %69 : vector<32x128xf32>
    %71 = arith.addf %59, %65 : vector<32x128xf32>
    %72 = arith.addf %71, %70 : vector<32x128xf32>
    %c0_15 = arith.constant 0 : index
    %c0_16 = arith.constant 0 : index
    %73 = vector.load %arg5[%c0_15, %c0_16] : memref<1x128xf32, #tpu.memory_space<vmem>>, vector<1x128xf32>
    %74 = vector.broadcast %73 : vector<1x128xf32> to vector<32x128xf32>
    %75 = arith.addf %72, %74 : vector<32x128xf32>
    %76 = arith.addf %6, %75 : vector<32x128xf32>
    %77 = vector.extract_strided_slice %76 {offsets = [0, 0], sizes = [16, 128], strides = [1, 1]} : vector<32x128xf32> to vector<16x128xf32>
    %78 = tpu.transpose %77, [1, 0] : vector<16x128xf32> -> vector<128x16xf32>
    %c0_17 = arith.constant 0 : index
    %c0_18 = arith.constant 0 : index
    %c0_19 = arith.constant 0 : index
    %79 = vector.load %arg6[%c0_17, %c0_18, %c0_19] : memref<2x128x16xf32, #tpu.memory_space<vmem>>, vector<1x128x16xf32>
    %80 = vector.shape_cast %79 : vector<1x128x16xf32> to vector<128x16xf32>
    %81 = vector.shape_cast %78 : vector<128x16xf32> to vector<1x128x16xf32>
    tpu.vector_store %arg6[%c0_17, %c0_18, %c0_19], %81 {strides = array<i32>} : memref<2x128x16xf32, #tpu.memory_space<vmem>>, vector<1x128x16xf32>,
    %82 = vector.extract_strided_slice %76 {offsets = [16, 0], sizes = [16, 128], strides = [1, 1]} : vector<32x128xf32> to vector<16x128xf32>
    %83 = tpu.transpose %82, [1, 0] : vector<16x128xf32> -> vector<128x16xf32>
    %c1_20 = arith.constant 1 : index
    %c0_21 = arith.constant 0 : index
    %c0_22 = arith.constant 0 : index
    %84 = vector.load %arg6[%c1_20, %c0_21, %c0_22] : memref<2x128x16xf32, #tpu.memory_space<vmem>>, vector<1x128x16xf32>
    %85 = vector.shape_cast %84 : vector<1x128x16xf32> to vector<128x16xf32>
    %86 = vector.shape_cast %83 : vector<128x16xf32> to vector<1x128x16xf32>
    tpu.vector_store %arg6[%c1_20, %c0_21, %c0_22], %86 {strides = array<i32>} : memref<2x128x16xf32, #tpu.memory_space<vmem>>, vector<1x128x16xf32>,
    return
  }
  func.func @transform_0(%arg0: i32) -> (i32, i32, i32) {
    %c0_i32 = arith.constant 0 : i32
    %c0_i32_0 = arith.constant 0 : i32
    %c0_i32_1 = arith.constant 0 : i32
    return %arg0, %c0_i32, %c0_i32_0 : i32, i32, i32
  }
  func.func @transform_1(%arg0: i32) -> (i32, i32) {
    %c0_i32 = arith.constant 0 : i32
    %c0_i32_0 = arith.constant 0 : i32
    %c0_i32_1 = arith.constant 0 : i32
    return %c0_i32, %c0_i32_0 : i32, i32
  }
  func.func @transform_2(%arg0: i32) -> (i32, i32) {
    %c0_i32 = arith.constant 0 : i32
    %c0_i32_0 = arith.constant 0 : i32
    %c0_i32_1 = arith.constant 0 : i32
    return %c0_i32, %c0_i32_0 : i32, i32
  }
  func.func @transform_3(%arg0: i32) -> (i32, i32) {
    %c0_i32 = arith.constant 0 : i32
    %c0_i32_0 = arith.constant 0 : i32
    %c0_i32_1 = arith.constant 0 : i32
    return %c0_i32, %c0_i32_0 : i32, i32
  }
  func.func @transform_4(%arg0: i32) -> (i32, i32) {
    %c0_i32 = arith.constant 0 : i32
    %c0_i32_0 = arith.constant 0 : i32
    %c0_i32_1 = arith.constant 0 : i32
    return %c0_i32, %c0_i32_0 : i32, i32
  }
  func.func @transform_5(%arg0: i32) -> (i32, i32, i32) {
    %c0_i32 = arith.constant 0 : i32
    %c0_i32_0 = arith.constant 0 : i32
    %c0_i32_1 = arith.constant 0 : i32
    return %arg0, %c0_i32, %c0_i32_0 : i32, i32, i32
  }
}

</mosaic_0001>

<llo_original>
// kernel: residual1d.1
$region0: #{residual1d.1}
  #allocation0 [shape = 'u32[]', space=smem, size = 0x4, offset = 0x4, fixed_abs, tag = 'smem constant byte address 0x4 - core index']
  #allocation1 [shape = 'u32[72,128]{1,0:T(1,128)}', space=vmem, size = 0x9000, scoped, tag = 'internal scratch']
  %s0 = inlined_call_operand.vmem [shape: f32[2,128,16], index: 0, kind: input, shape index: {}]
  %s1 = inlined_call_operand.vmem [shape: bf16[128,384], index: 1, kind: input, shape index: {}]
  %s2 = inlined_call_operand.vmem [shape: f32[1,128], index: 2, kind: input, shape index: {}]
  %s3 = inlined_call_operand.vmem [shape: bf16[128,384], index: 3, kind: input, shape index: {}]
  %s4 = inlined_call_operand.vmem [shape: f32[1,128], index: 4, kind: input, shape index: {}]
  %s5 = inlined_call_operand.vmem [shape: f32[2,128,16], index: 5, kind: output, shape index: {}]
  %s6 = sld [smem:[#allocation0]]
  $region30: #{residual1d.1} parent=0
    _
  %s8 = ssub.s32 1, %s6
  %s9 = scalar_select 0, %s8, %s6
  // Predicated region
  $region2: #{residual1d.1} parent=0 // pred_check
    _
  $region3: #{residual1d.1} parent=0 // pred_check_branch
    %11 = sbr.rel (0) target = $region5
  $region4: #{residual1d.1} parent=0 // pred_region
    _
  $region5: #{residual1d.1} parent=0 // pred_fallthru
    _
  // Predicated region
  $region6: #{residual1d.1} parent=0 // pred_check
    _
  $region7: #{residual1d.1} parent=0 // pred_check_branch
    %13 = sbr.rel (0) target = $region9
  $region8: #{residual1d.1} parent=0 // pred_region
    _
  $region9: #{residual1d.1} parent=0 // pred_fallthru
    _
  // Predicated region
  $region10: #{residual1d.1} parent=0 // pred_check
    _
  $region11: #{residual1d.1} parent=0 // pred_check_branch
    %15 = sbr.rel (0) target = $region13
  $region12: #{residual1d.1} parent=0 // pred_region
    _
  $region13: #{residual1d.1} parent=0 // pred_fallthru
    _
  // Predicated region
  $region14: #{residual1d.1} parent=0 // pred_check
    _
  $region15: #{residual1d.1} parent=0 // pred_check_branch
    %17 = sbr.rel (0) target = $region17
  $region16: #{residual1d.1} parent=0 // pred_region
    _
  $region17: #{residual1d.1} parent=0 // pred_fallthru
    _
  // Predicated region
  $region18: #{residual1d.1} parent=0 // pred_check
    _
  $region19: #{residual1d.1} parent=0 // pred_check_branch
    %19 = sbr.rel (0) target = $region21
  $region20: #{residual1d.1} parent=0 // pred_region
    _
  $region21: #{residual1d.1} parent=0 // pred_fallthru
    _
  %v20 = vld [vmem:[%s0] sm:$0xff]
  %v21 = vld [vmem:[%s0 + $0x8] sm:$0xff]
  %v22 = vld [vmem:[%s0 + $0x10] sm:$0xff]
  %v23 = vld [vmem:[%s0 + $0x18] sm:$0xff]
  %v24 = vld [vmem:[%s0 + $0x20] sm:$0xff]
  %v25 = vld [vmem:[%s0 + $0x28] sm:$0xff]
  %v26 = vld [vmem:[%s0 + $0x30] sm:$0xff]
  %v27 = vld [vmem:[%s0 + $0x38] sm:$0xff]
  %v28 = vld [vmem:[%s0 + $0x40] sm:$0xff]
  %v29 = vld [vmem:[%s0 + $0x48] sm:$0xff]
  %v30 = vld [vmem:[%s0 + $0x50] sm:$0xff]
  %v31 = vld [vmem:[%s0 + $0x58] sm:$0xff]
  %v32 = vld [vmem:[%s0 + $0x60] sm:$0xff]
  %v33 = vld [vmem:[%s0 + $0x68] sm:$0xff]
  %v34 = vld [vmem:[%s0 + $0x70] sm:$0xff]
  %v35 = vld [vmem:[%s0 + $0x78] sm:$0xff]
  %36 = vxpose.xlu0.b32.start [1/16] %v20, 128
  %37 = vxpose.xlu0.b32.cont [2/16] %v21, 128
  %38 = vxpose.xlu0.b32.cont [3/16] %v22, 128
  %39 = vxpose.xlu0.b32.cont [4/16] %v23, 128
  %40 = vxpose.xlu0.b32.cont [5/16] %v24, 128
  %41 = vxpose.xlu0.b32.cont [6/16] %v25, 128
  %42 = vxpose.xlu0.b32.cont [7/16] %v26, 128
  %43 = vxpose.xlu0.b32.cont [8/16] %v27, 128
  %44 = vxpose.xlu0.b32.cont [9/16] %v28, 128
  %45 = vxpose.xlu0.b32.cont [10/16] %v29, 128
  %46 = vxpose.xlu0.b32.cont [11/16] %v30, 128
  %47 = vxpose.xlu0.b32.cont [12/16] %v31, 128
  %48 = vxpose.xlu0.b32.cont [13/16] %v32, 128
  %49 = vxpose.xlu0.b32.cont [14/16] %v33, 128
  %50 = vxpose.xlu0.b32.cont [15/16] %v34, 128
  %51 = vxpose.xlu0.b32.end [16/16] %v35, 128
  %v52 = vpop.trf.xlu0
  %v53 = vpop.trf.xlu0
  %v54 = vpop.trf.xlu0
  %v55 = vpop.trf.xlu0
  %v56 = vpop.trf.xlu0
  %v57 = vpop.trf.xlu0
  %v58 = vpop.trf.xlu0
  %v59 = vpop.trf.xlu0
  %v60 = vpop.trf.xlu0
  %v61 = vpop.trf.xlu0
  %v62 = vpop.trf.xlu0
  %v63 = vpop.trf.xlu0
  %v64 = vpop.trf.xlu0
  %v65 = vpop.trf.xlu0
  %v66 = vpop.trf.xlu0
  %v67 = vpop.trf.xlu0
  %s68 = scalar_lea.vmem %s0, 128
  %v69 = vld [vmem:[%s68] sm:$0xff]
  %v70 = vld [vmem:[%s68 + $0x8] sm:$0xff]
  %v71 = vld [vmem:[%s68 + $0x10] sm:$0xff]
  %v72 = vld [vmem:[%s68 + $0x18] sm:$0xff]
  %v73 = vld [vmem:[%s68 + $0x20] sm:$0xff]
  %v74 = vld [vmem:[%s68 + $0x28] sm:$0xff]
  %v75 = vld [vmem:[%s68 + $0x30] sm:$0xff]
  %v76 = vld [vmem:[%s68 + $0x38] sm:$0xff]
  %v77 = vld [vmem:[%s68 + $0x40] sm:$0xff]
  %v78 = vld [vmem:[%s68 + $0x48] sm:$0xff]
  %v79 = vld [vmem:[%s68 + $0x50] sm:$0xff]
  %v80 = vld [vmem:[%s68 + $0x58] sm:$0xff]
  %v81 = vld [vmem:[%s68 + $0x60] sm:$0xff]
  %v82 = vld [vmem:[%s68 + $0x68] sm:$0xff]
  %v83 = vld [vmem:[%s68 + $0x70] sm:$0xff]
  %v84 = vld [vmem:[%s68 + $0x78] sm:$0xff]
  %85 = vxpose.xlu0.b32.start [1/16] %v69, 128
  %86 = vxpose.xlu0.b32.cont [2/16] %v70, 128
  %87 = vxpose.xlu0.b32.cont [3/16] %v71, 128
  %88 = vxpose.xlu0.b32.cont [4/16] %v72, 128
  %89 = vxpose.xlu0.b32.cont [5/16] %v73, 128
  %90 = vxpose.xlu0.b32.cont [6/16] %v74, 128
  %91 = vxpose.xlu0.b32.cont [7/16] %v75, 128
  %92 = vxpose.xlu0.b32.cont [8/16] %v76, 128
  %93 = vxpose.xlu0.b32.cont [9/16] %v77, 128
  %94 = vxpose.xlu0.b32.cont [10/16] %v78, 128
  %95 = vxpose.xlu0.b32.cont [11/16] %v79, 128
  %96 = vxpose.xlu0.b32.cont [12/16] %v80, 128
  %97 = vxpose.xlu0.b32.cont [13/16] %v81, 128
  %98 = vxpose.xlu0.b32.cont [14/16] %v82, 128
  %99 = vxpose.xlu0.b32.cont [15/16] %v83, 128
  %100 = vxpose.xlu0.b32.end [16/16] %v84, 128
  %v101 = vpop.trf.xlu0
  %v102 = vpop.trf.xlu0
  %v103 = vpop.trf.xlu0
  %v104 = vpop.trf.xlu0
  %v105 = vpop.trf.xlu0
  %v106 = vpop.trf.xlu0
  %v107 = vpop.trf.xlu0
  %v108 = vpop.trf.xlu0
  %v109 = vpop.trf.xlu0
  %v110 = vpop.trf.xlu0
  %v111 = vpop.trf.xlu0
  %v112 = vpop.trf.xlu0
  %v113 = vpop.trf.xlu0
  %v114 = vpop.trf.xlu0
  %v115 = vpop.trf.xlu0
  %v116 = vpop.trf.xlu0
  %v117 = vlaneseq
  %v118 = vshrl.u32 %v117, 7
  %v119 = vadd.s32 %v118, 8
  %v120 = vadd.s32 %v118, 16
  %v121 = vadd.s32 %v118, 24
  %vm122 = vcmp.lt.s32.totalorder %v118, 0
  %v123 = vsub.s32 0, %v118
  %v124 = vsel %vm122, %v123, %v118
  %v125 = vshrl.u32 %v124, 4
  %v126 = vand.u32 %v124, 15
  %v127 = vsub.s32 0, %v126
  %v128 = vsel %vm122, %v127, %v126
  %vm129 = vcmp.lt.s32.totalorder %v119, 0
  %v130 = vsub.s32 0, %v119
  %v131 = vsel %vm129, %v130, %v119
  %v132 = vshrl.u32 %v131, 4
  %v133 = vand.u32 %v131, 15
  %v134 = vsub.s32 0, %v133
  %v135 = vsel %vm129, %v134, %v133
  %vm136 = vcmp.lt.s32.totalorder %v120, 0
  %v137 = vsub.s32 0, %v120
  %v138 = vsel %vm136, %v137, %v120
  %v139 = vshrl.u32 %v138, 4
  %v140 = vand.u32 %v138, 15
  %v141 = vsub.s32 0, %v140
  %v142 = vsel %vm136, %v141, %v140
  %vm143 = vcmp.lt.s32.totalorder %v121, 0
  %v144 = vsub.s32 0, %v121
  %v145 = vsel %vm143, %v144, %v121
  %v146 = vshrl.u32 %v145, 4
  %v147 = vand.u32 %v145, 15
  %v148 = vsub.s32 0, %v147
  %v149 = vsel %vm143, %v148, %v147
  %vm150 = vcmp.ne.s32.totalorder %v128, 0
  %vm151 = vcmp.ne.s32.totalorder %v135, 0
  %vm152 = vcmp.ne.s32.totalorder %v142, 0
  %vm153 = vcmp.ne.s32.totalorder %v149, 0
  %vm154 = vcmp.lt.s32.totalorder %v128, 0
  %vm155 = vcmp.lt.s32.totalorder %v135, 0
  %vm156 = vcmp.lt.s32.totalorder %v142, 0
  %vm157 = vcmp.lt.s32.totalorder %v149, 0
  %vm158 = vmand %vm154, %vm150
  %vm159 = vmand %vm155, %vm151
  %vm160 = vmand %vm156, %vm152
  %vm161 = vmand %vm157, %vm153
  %v162 = vadd.s32 %v128, 16
  %v163 = vadd.s32 %v135, 16
  %v164 = vadd.s32 %v142, 16
  %v165 = vadd.s32 %v149, 16
  %v166 = vsel %vm158, %v162, %v128
  %v167 = vsel %vm159, %v163, %v135
  %v168 = vsel %vm160, %v164, %v142
  %v169 = vsel %vm161, %v165, %v149
  %vm170 = vcmp.ne.s32.totalorder %v166, 0
  %vm171 = vcmp.ne.s32.totalorder %v167, 0
  %vm172 = vcmp.ne.s32.totalorder %v168, 0
  %vm173 = vcmp.ne.s32.totalorder %v169, 0
  %v174 = vsel %vm170, 1, 0
  %v175 = vsel %vm171, 1, 0
  %v176 = vsel %vm172, 1, 0
  %v177 = vsel %vm173, 1, 0
  %v178 = vcvt.s32.f32 %v174
  %v179 = vcvt.s32.f32 %v175
  %v180 = vcvt.s32.f32 %v176
  %v181 = vcvt.s32.f32 %v177
  %vm182 = vcmp.ne.s32.totalorder %v166, 15
  %vm183 = vcmp.ne.s32.totalorder %v167, 15
  %vm184 = vcmp.ne.s32.totalorder %v168, 15
  %vm185 = vcmp.ne.s32.totalorder %v169, 15
  %v186 = vsel %vm182, 1, 0
  %v187 = vsel %vm183, 1, 0
  %v188 = vsel %vm184, 1, 0
  %v189 = vsel %vm185, 1, 0
  %v190 = vcvt.s32.f32 %v186
  %v191 = vcvt.s32.f32 %v187
  %v192 = vcvt.s32.f32 %v188
  %v193 = vcvt.s32.f32 %v189
  %v194 = vtanh.pop %v52
  %v195 = vtanh.pop %v53
  %v196 = vtanh.pop %v101
  %v197 = vtanh.pop %v102
  %v198 = vpack.c.bf16 %v195, %v194
  %v199 = vpack.c.bf16 %v197, %v196
  %v200 = vld [vmem:[%s1] sm:$0xff]
  %v201 = vld [vmem:[%s1 + $0x8] sm:$0xf]
  %v202 = vld [vmem:[%s1 + $0xc] sm:$0xff]
  %v203 = vld [vmem:[%s1 + $0x14] sm:$0xf]
  %v204 = vld [vmem:[%s1 + $0x18] sm:$0xff]
  %v205 = vld [vmem:[%s1 + $0x20] sm:$0xf]
  %v206 = vld [vmem:[%s1 + $0x24] sm:$0xff]
  %v207 = vld [vmem:[%s1 + $0x2c] sm:$0xf]
  %v208 = vld [vmem:[%s1 + $0x30] sm:$0xff]
  %v209 = vld [vmem:[%s1 + $0x38] sm:$0xf]
  %v210 = vld [vmem:[%s1 + $0x3c] sm:$0xff]
  %v211 = vld [vmem:[%s1 + $0x44] sm:$0xf]
  %v212 = vld [vmem:[%s1 + $0x48] sm:$0xff]
  %v213 = vld [vmem:[%s1 + $0x50] sm:$0xf]
  %v214 = vld [vmem:[%s1 + $0x54] sm:$0xff]
  %v215 = vld [vmem:[%s1 + $0x5c] sm:$0xf]
  %v216 = vld [vmem:[%s1 + $0x60] sm:$0xff]
  %v217 = vld [vmem:[%s1 + $0x68] sm:$0xf]
  %v218 = vld [vmem:[%s1 + $0x6c] sm:$0xff]
  %v219 = vld [vmem:[%s1 + $0x74] sm:$0xf]
  %v220 = vld [vmem:[%s1 + $0x78] sm:$0xff]
  %v221 = vld [vmem:[%s1 + $0x80] sm:$0xf]
  %v222 = vld [vmem:[%s1 + $0x84] sm:$0xff]
  %v223 = vld [vmem:[%s1 + $0x8c] sm:$0xf]
  %v224 = vld [vmem:[%s1 + $0x90] sm:$0xff]
  %v225 = vld [vmem:[%s1 + $0x98] sm:$0xf]
  %v226 = vld [vmem:[%s1 + $0x9c] sm:$0xff]
  %v227 = vld [vmem:[%s1 + $0xa4] sm:$0xf]
  %v228 = vld [vmem:[%s1 + $0xa8] sm:$0xff]
  %v229 = vld [vmem:[%s1 + $0xb0] sm:$0xf]
  %v230 = vld [vmem:[%s1 + $0xb4] sm:$0xff]
  %v231 = vld [vmem:[%s1 + $0xbc] sm:$0xf]
  %v264 = vunpack.c.l.b16 %v200
  %v265 = vunpack.c.h.b16 %v200
  %v266 = vunpack.c.l.b16 %v201
  %v267 = vunpack.c.l.b16 %v202
  %v268 = vunpack.c.h.b16 %v202
  %v269 = vunpack.c.l.b16 %v203
  %v270 = vunpack.c.l.b16 %v204
  %v271 = vunpack.c.h.b16 %v204
  %v272 = vunpack.c.l.b16 %v205
  %v273 = vunpack.c.l.b16 %v206
  %v274 = vunpack.c.h.b16 %v206
  %v275 = vunpack.c.l.b16 %v207
  %v276 = vunpack.c.l.b16 %v208
  %v277 = vunpack.c.h.b16 %v208
  %v278 = vunpack.c.l.b16 %v209
  %v279 = vunpack.c.l.b16 %v210
  %v280 = vunpack.c.h.b16 %v210
  %v281 = vunpack.c.l.b16 %v211
  %v282 = vunpack.c.l.b16 %v212
  %v283 = vunpack.c.h.b16 %v212
  %v284 = vunpack.c.l.b16 %v213
  %v285 = vunpack.c.l.b16 %v214
  %v286 = vunpack.c.h.b16 %v214
  %v287 = vunpack.c.l.b16 %v215
  %v288 = vunpack.c.l.b16 %v216
  %v289 = vunpack.c.h.b16 %v216
  %v290 = vunpack.c.l.b16 %v217
  %v291 = vunpack.c.l.b16 %v218
  %v292 = vunpack.c.h.b16 %v218
  %v293 = vunpack.c.l.b16 %v219
  %v294 = vunpack.c.l.b16 %v220
  %v295 = vunpack.c.h.b16 %v220
  %v296 = vunpack.c.l.b16 %v221
  %v297 = vunpack.c.l.b16 %v222
  %v298 = vunpack.c.h.b16 %v222
  %v299 = vunpack.c.l.b16 %v223
  %v300 = vunpack.c.l.b16 %v224
  %v301 = vunpack.c.h.b16 %v224
  %v302 = vunpack.c.l.b16 %v225
  %v303 = vunpack.c.l.b16 %v226
  %v304 = vunpack.c.h.b16 %v226
  %v305 = vunpack.c.l.b16 %v227
  %v306 = vunpack.c.l.b16 %v228
  %v307 = vunpack.c.h.b16 %v228
  %v308 = vunpack.c.l.b16 %v229
  %v309 = vunpack.c.l.b16 %v230
  %v310 = vunpack.c.h.b16 %v230
  %v311 = vunpack.c.l.b16 %v231
  %v312 = vpack.c.b16 %v267, %v264
  %v313 = vpack.c.b16 %v268, %v265
  %v314 = vpack.c.b16 %v269, %v266
  %v315 = vpack.c.b16 %v273, %v270
  %v316 = vpack.c.b16 %v274, %v271
  %v317 = vpack.c.b16 %v275, %v272
  %v318 = vpack.c.b16 %v279, %v276
  %v319 = vpack.c.b16 %v280, %v277
  %v320 = vpack.c.b16 %v281, %v278
  %v321 = vpack.c.b16 %v285, %v282
  %v322 = vpack.c.b16 %v286, %v283
  %v323 = vpack.c.b16 %v287, %v284
  %v324 = vpack.c.b16 %v291, %v288
  %v325 = vpack.c.b16 %v292, %v289
  %v326 = vpack.c.b16 %v293, %v290
  %v327 = vpack.c.b16 %v297, %v294
  %v328 = vpack.c.b16 %v298, %v295
  %v329 = vpack.c.b16 %v299, %v296
  %v330 = vpack.c.b16 %v303, %v300
  %v331 = vpack.c.b16 %v304, %v301
  %v332 = vpack.c.b16 %v305, %v302
  %v333 = vpack.c.b16 %v309, %v306
  %v334 = vpack.c.b16 %v310, %v307
  %v335 = vpack.c.b16 %v311, %v308
  %360 = vmatpush.bf16.msra.mxu0 %v333
  %361 = vmatpush.bf16.msra.mxu0 %v330
  %362 = vmatpush.bf16.msra.mxu0 %v327
  %363 = vmatpush.bf16.msra.mxu0 %v324
  %364 = vmatpush.bf16.msra.mxu0 %v321
  %365 = vmatpush.bf16.msra.mxu0 %v318
  %366 = vmatpush.bf16.msra.mxu0 %v315
  %367 = vmatpush.bf16.msra.mxu0 %v312
  %368 = vmatmul.bf16.gmra.mxu0 %v198
  %v369 = vpop.f32.mrf.mxu0
  %v370 = vadd.f32 0.0, %v369
  %v371 = vpop.f32.mrf.mxu0
  %v372 = vadd.f32 0.0, %v371
  %373 = vmatmul.bf16.gmra.mxu0 %v199
  %v374 = vpop.f32.mrf.mxu0
  %v375 = vadd.f32 0.0, %v374
  %v376 = vpop.f32.mrf.mxu0
  %v377 = vadd.f32 0.0, %v376
  %378 = vdwg.mxu0
  %379 = vmatpush.bf16.msra.mxu0 %v334
  %380 = vmatpush.bf16.msra.mxu0 %v331
  %381 = vmatpush.bf16.msra.mxu0 %v328
  %382 = vmatpush.bf16.msra.mxu0 %v325
  %383 = vmatpush.bf16.msra.mxu0 %v322
  %384 = vmatpush.bf16.msra.mxu0 %v319
  %385 = vmatpush.bf16.msra.mxu0 %v316
  %386 = vmatpush.bf16.msra.mxu0 %v313
  %387 = vmatmul.bf16.gmra.mxu0 %v198
  %v388 = vpop.f32.mrf.mxu0
  %v389 = vadd.f32 0.0, %v388
  %v390 = vpop.f32.mrf.mxu0
  %v391 = vadd.f32 0.0, %v390
  %392 = vmatmul.bf16.gmra.mxu0 %v199
  %v393 = vpop.f32.mrf.mxu0
  %v394 = vadd.f32 0.0, %v393
  %v395 = vpop.f32.mrf.mxu0
  %v396 = vadd.f32 0.0, %v395
  %397 = vdwg.mxu0
  %398 = vmatpush.bf16.msra.mxu0 %v335
  %399 = vmatpush.bf16.msra.mxu0 %v332
  %400 = vmatpush.bf16.msra.mxu0 %v329
  %401 = vmatpush.bf16.msra.mxu0 %v326
  %402 = vmatpush.bf16.msra.mxu0 %v323
  %403 = vmatpush.bf16.msra.mxu0 %v320
  %404 = vmatpush.bf16.msra.mxu0 %v317
  %405 = vmatpush.bf16.msra.mxu0 %v314
  %406 = vmatmul.bf16.gmra.mxu0 %v198
  %v407 = vpop.f32.mrf.mxu0
  %v408 = vadd.f32 0.0, %v407
  %v409 = vpop.f32.mrf.mxu0
  %v410 = vadd.f32 0.0, %v409
  %411 = vmatmul.bf16.gmra.mxu0 %v199
  %v412 = vpop.f32.mrf.mxu0
  %v413 = vadd.f32 0.0, %v412
  %v414 = vpop.f32.mrf.mxu0
  %v415 = vadd.f32 0.0, %v414
  %416 = vdwg.mxu0
  %v418 = vrot.slane %v377, 7
  %vm423 = vcmask 1040384
  %v424 = vrot.slane %v370, 7
  %v425 = vrot.slane %v372, 7
  %v426 = vsel %vm423, %v424, %v425
  %v427 = vrot.slane %v375, 7
  %v428 = vsel %vm423, %v425, %v427
  %v429 = vsel %vm423, %v427, %v418
  %v434 = vsel %vm423, %v418, %v424
  %v435 = vmul.f32 %v434, %v178
  %v436 = vmul.f32 %v426, %v179
  %v437 = vmul.f32 %v428, %v180
  %v438 = vmul.f32 %v429, %v181
  %vm443 = vcmask 1046528
  %v444 = vrot.slane %v408, 1
  %v445 = vrot.slane %v410, 1
  %v446 = vsel %vm443, %v444, %v445
  %v447 = vrot.slane %v413, 1
  %v448 = vsel %vm443, %v445, %v447
  %v449 = vrot.slane %v415, 1
  %v450 = vsel %vm443, %v447, %v449
  %v456 = vsel %vm443, %v449, %v444
  %v457 = vmul.f32 %v446, %v190
  %v458 = vmul.f32 %v448, %v191
  %v459 = vmul.f32 %v450, %v192
  %v460 = vmul.f32 %v456, %v193
  %v461 = vadd.f32 %v389, %v435
  %v462 = vadd.f32 %v391, %v436
  %v463 = vadd.f32 %v394, %v437
  %v464 = vadd.f32 %v396, %v438
  %v465 = vadd.f32 %v461, %v457
  %v466 = vadd.f32 %v462, %v458
  %v467 = vadd.f32 %v463, %v459
  %v468 = vadd.f32 %v464, %v460
  %v469 = vld [vmem:[%s2] sm:$0x1]
  %v471 = vperm.slane %v469, 0
  %v473 = vadd.f32 %v465, %v471
  %v474 = vadd.f32 %v466, %v471
  %v475 = vadd.f32 %v467, %v471
  %v476 = vadd.f32 %v468, %v471
  %v477 = vtanh.pop %v473
  %v478 = vtanh.pop %v474
  %v479 = vtanh.pop %v475
  %v480 = vtanh.pop %v476
  %v481 = vpack.c.bf16 %v478, %v477
  %v482 = vpack.c.bf16 %v480, %v479
  %v483 = vld [vmem:[%s3] sm:$0xff]
  %v484 = vld [vmem:[%s3 + $0x8] sm:$0xf]
  %v485 = vld [vmem:[%s3 + $0xc] sm:$0xff]
  %v486 = vld [vmem:[%s3 + $0x14] sm:$0xf]
  %v487 = vld [vmem:[%s3 + $0x18] sm:$0xff]
  %v488 = vld [vmem:[%s3 + $0x20] sm:$0xf]
  %v489 = vld [vmem:[%s3 + $0x24] sm:$0xff]
  %v490 = vld [vmem:[%s3 + $0x2c] sm:$0xf]
  %v491 = vld [vmem:[%s3 + $0x30] sm:$0xff]
  %v492 = vld [vmem:[%s3 + $0x38] sm:$0xf]
  %v493 = vld [vmem:[%s3 + $0x3c] sm:$0xff]
  %v494 = vld [vmem:[%s3 + $0x44] sm:$0xf]
  %v495 = vld [vmem:[%s3 + $0x48] sm:$0xff]
  %v496 = vld [vmem:[%s3 + $0x50] sm:$0xf]
  %v497 = vld [vmem:[%s3 + $0x54] sm:$0xff]
  %v498 = vld [vmem:[%s3 + $0x5c] sm:$0xf]
  %v499 = vld [vmem:[%s3 + $0x60] sm:$0xff]
  %v500 = vld [vmem:[%s3 + $0x68] sm:$0xf]
  %v501 = vld [vmem:[%s3 + $0x6c] sm:$0xff]
  %v502 = vld [vmem:[%s3 + $0x74] sm:$0xf]
  %v503 = vld [vmem:[%s3 + $0x78] sm:$0xff]
  %v504 = vld [vmem:[%s3 + $0x80] sm:$0xf]
  %v505 = vld [vmem:[%s3 + $0x84] sm:$0xff]
  %v506 = vld [vmem:[%s3 + $0x8c] sm:$0xf]
  %v507 = vld [vmem:[%s3 + $0x90] sm:$0xff]
  %v508 = vld [vmem:[%s3 + $0x98] sm:$0xf]
  %v509 = vld [vmem:[%s3 + $0x9c] sm:$0xff]
  %v510 = vld [vmem:[%s3 + $0xa4] sm:$0xf]
  %v511 = vld [vmem:[%s3 + $0xa8] sm:$0xff]
  %v512 = vld [vmem:[%s3 + $0xb0] sm:$0xf]
  %v513 = vld [vmem:[%s3 + $0xb4] sm:$0xff]
  %v514 = vld [vmem:[%s3 + $0xbc] sm:$0xf]
  %v547 = vunpack.c.l.b16 %v483
  %v548 = vunpack.c.h.b16 %v483
  %v549 = vunpack.c.l.b16 %v484
  %v550 = vunpack.c.l.b16 %v485
  %v551 = vunpack.c.h.b16 %v485
  %v552 = vunpack.c.l.b16 %v486
  %v553 = vunpack.c.l.b16 %v487
  %v554 = vunpack.c.h.b16 %v487
  %v555 = vunpack.c.l.b16 %v488
  %v556 = vunpack.c.l.b16 %v489
  %v557 = vunpack.c.h.b16 %v489
  %v558 = vunpack.c.l.b16 %v490
  %v559 = vunpack.c.l.b16 %v491
  %v560 = vunpack.c.h.b16 %v491
  %v561 = vunpack.c.l.b16 %v492
  %v562 = vunpack.c.l.b16 %v493
  %v563 = vunpack.c.h.b16 %v493
  %v564 = vunpack.c.l.b16 %v494
  %v565 = vunpack.c.l.b16 %v495
  %v566 = vunpack.c.h.b16 %v495
  %v567 = vunpack.c.l.b16 %v496
  %v568 = vunpack.c.l.b16 %v497
  %v569 = vunpack.c.h.b16 %v497
  %v570 = vunpack.c.l.b16 %v498
  %v571 = vunpack.c.l.b16 %v499
  %v572 = vunpack.c.h.b16 %v499
  %v573 = vunpack.c.l.b16 %v500
  %v574 = vunpack.c.l.b16 %v501
  %v575 = vunpack.c.h.b16 %v501
  %v576 = vunpack.c.l.b16 %v502
  %v577 = vunpack.c.l.b16 %v503
  %v578 = vunpack.c.h.b16 %v503
  %v579 = vunpack.c.l.b16 %v504
  %v580 = vunpack.c.l.b16 %v505
  %v581 = vunpack.c.h.b16 %v505
  %v582 = vunpack.c.l.b16 %v506
  %v583 = vunpack.c.l.b16 %v507
  %v584 = vunpack.c.h.b16 %v507
  %v585 = vunpack.c.l.b16 %v508
  %v586 = vunpack.c.l.b16 %v509
  %v587 = vunpack.c.h.b16 %v509
  %v588 = vunpack.c.l.b16 %v510
  %v589 = vunpack.c.l.b16 %v511
  %v590 = vunpack.c.h.b16 %v511
  %v591 = vunpack.c.l.b16 %v512
  %v592 = vunpack.c.l.b16 %v513
  %v593 = vunpack.c.h.b16 %v513
  %v594 = vunpack.c.l.b16 %v514
  %v595 = vpack.c.b16 %v550, %v547
  %v596 = vpack.c.b16 %v551, %v548
  %v597 = vpack.c.b16 %v552, %v549
  %v598 = vpack.c.b16 %v556, %v553
  %v599 = vpack.c.b16 %v557, %v554
  %v600 = vpack.c.b16 %v558, %v555
  %v601 = vpack.c.b16 %v562, %v559
  %v602 = vpack.c.b16 %v563, %v560
  %v603 = vpack.c.b16 %v564, %v561
  %v604 = vpack.c.b16 %v568, %v565
  %v605 = vpack.c.b16 %v569, %v566
  %v606 = vpack.c.b16 %v570, %v567
  %v607 = vpack.c.b16 %v574, %v571
  %v608 = vpack.c.b16 %v575, %v572
  %v609 = vpack.c.b16 %v576, %v573
  %v610 = vpack.c.b16 %v580, %v577
  %v611 = vpack.c.b16 %v581, %v578
  %v612 = vpack.c.b16 %v582, %v579
  %v613 = vpack.c.b16 %v586, %v583
  %v614 = vpack.c.b16 %v587, %v584
  %v615 = vpack.c.b16 %v588, %v585
  %v616 = vpack.c.b16 %v592, %v589
  %v617 = vpack.c.b16 %v593, %v590
  %v618 = vpack.c.b16 %v594, %v591
  %643 = vmatpush.bf16.msra.mxu0 %v616
  %644 = vmatpush.bf16.msra.mxu0 %v613
  %645 = vmatpush.bf16.msra.mxu0 %v610
  %646 = vmatpush.bf16.msra.mxu0 %v607
  %647 = vmatpush.bf16.msra.mxu0 %v604
  %648 = vmatpush.bf16.msra.mxu0 %v601
  %649 = vmatpush.bf16.msra.mxu0 %v598
  %650 = vmatpush.bf16.msra.mxu0 %v595
  %651 = vmatmul.bf16.gmra.mxu0 %v481
  %v652 = vpop.f32.mrf.mxu0
  %v653 = vadd.f32 0.0, %v652
  %v654 = vpop.f32.mrf.mxu0
  %v655 = vadd.f32 0.0, %v654
  %656 = vmatmul.bf16.gmra.mxu0 %v482
  %v657 = vpop.f32.mrf.mxu0
  %v658 = vadd.f32 0.0, %v657
  %v659 = vpop.f32.mrf.mxu0
  %v660 = vadd.f32 0.0, %v659
  %661 = vdwg.mxu0
  %662 = vmatpush.bf16.msra.mxu0 %v617
  %663 = vmatpush.bf16.msra.mxu0 %v614
  %664 = vmatpush.bf16.msra.mxu0 %v611
  %665 = vmatpush.bf16.msra.mxu0 %v608
  %666 = vmatpush.bf16.msra.mxu0 %v605
  %667 = vmatpush.bf16.msra.mxu0 %v602
  %668 = vmatpush.bf16.msra.mxu0 %v599
  %669 = vmatpush.bf16.msra.mxu0 %v596
  %670 = vmatmul.bf16.gmra.mxu0 %v481
  %v671 = vpop.f32.mrf.mxu0
  %v672 = vadd.f32 0.0, %v671
  %v673 = vpop.f32.mrf.mxu0
  %v674 = vadd.f32 0.0, %v673
  %675 = vmatmul.bf16.gmra.mxu0 %v482
  %v676 = vpop.f32.mrf.mxu0
  %v677 = vadd.f32 0.0, %v676
  %v678 = vpop.f32.mrf.mxu0
  %v679 = vadd.f32 0.0, %v678
  %680 = vdwg.mxu0
  %681 = vmatpush.bf16.msra.mxu0 %v618
  %682 = vmatpush.bf16.msra.mxu0 %v615
  %683 = vmatpush.bf16.msra.mxu0 %v612
  %684 = vmatpush.bf16.msra.mxu0 %v609
  %685 = vmatpush.bf16.msra.mxu0 %v606
  %686 = vmatpush.bf16.msra.mxu0 %v603
  %687 = vmatpush.bf16.msra.mxu0 %v600
  %688 = vmatpush.bf16.msra.mxu0 %v597
  %689 = vmatmul.bf16.gmra.mxu0 %v481
  %v690 = vpop.f32.mrf.mxu0
  %v691 = vadd.f32 0.0, %v690
  %v692 = vpop.f32.mrf.mxu0
  %v693 = vadd.f32 0.0, %v692
  %694 = vmatmul.bf16.gmra.mxu0 %v482
  %v695 = vpop.f32.mrf.mxu0
  %v696 = vadd.f32 0.0, %v695
  %v697 = vpop.f32.mrf.mxu0
  %v698 = vadd.f32 0.0, %v697
  %699 = vdwg.mxu0
  %v701 = vrot.slane %v660, 7
  %v706 = vrot.slane %v653, 7
  %v707 = vrot.slane %v655, 7
  %v708 = vsel %vm423, %v706, %v707
  %v709 = vrot.slane %v658, 7
  %v710 = vsel %vm423, %v707, %v709
  %v711 = vsel %vm423, %v709, %v701
  %v716 = vsel %vm423, %v701, %v706
  %v717 = vmul.f32 %v716, %v178
  %v718 = vmul.f32 %v708, %v179
  %v719 = vmul.f32 %v710, %v180
  %v720 = vmul.f32 %v711, %v181
  %v725 = vrot.slane %v691, 1
  %v726 = vrot.slane %v693, 1
  %v727 = vsel %vm443, %v725, %v726
  %v728 = vrot.slane %v696, 1
  %v729 = vsel %vm443, %v726, %v728
  %v730 = vrot.slane %v698, 1
  %v731 = vsel %vm443, %v728, %v730
  %v737 = vsel %vm443, %v730, %v725
  %v738 = vmul.f32 %v727, %v190
  %v739 = vmul.f32 %v729, %v191
  %v740 = vmul.f32 %v731, %v192
  %v741 = vmul.f32 %v737, %v193
  %v742 = vadd.f32 %v672, %v717
  %v743 = vadd.f32 %v674, %v718
  %v744 = vadd.f32 %v677, %v719
  %v745 = vadd.f32 %v679, %v720
  %v746 = vadd.f32 %v742, %v738
  %v747 = vadd.f32 %v743, %v739
  %v748 = vadd.f32 %v744, %v740
  %v749 = vadd.f32 %v745, %v741
  %v750 = vld [vmem:[%s4] sm:$0x1]
  %v752 = vperm.slane %v750, 0
  %v754 = vadd.f32 %v746, %v752
  %v755 = vadd.f32 %v747, %v752
  %v756 = vadd.f32 %v748, %v752
  %v757 = vadd.f32 %v749, %v752
  %v758 = vadd.f32 %v52, %v754
  %v759 = vadd.f32 %v53, %v755
  %v760 = vadd.f32 %v101, %v756
  %v761 = vadd.f32 %v102, %v757
  %762 = vxpose.xlu0.b32.start [1/16] %v758, 128
  %763 = vxpose.xlu0.b32.cont [2/16] %v759, 128
  %764 = vxpose.xlu0.b32.cont [3/16] 0.0, 128
  %765 = vxpose.xlu0.b32.cont [4/16] 0.0, 128
  %766 = vxpose.xlu0.b32.cont [5/16] 0.0, 128
  %767 = vxpose.xlu0.b32.cont [6/16] 0.0, 128
  %768 = vxpose.xlu0.b32.cont [7/16] 0.0, 128
  %769 = vxpose.xlu0.b32.cont [8/16] 0.0, 128
  %770 = vxpose.xlu0.b32.cont [9/16] 0.0, 128
  %771 = vxpose.xlu0.b32.cont [10/16] 0.0, 128
  %772 = vxpose.xlu0.b32.cont [11/16] 0.0, 128
  %773 = vxpose.xlu0.b32.cont [12/16] 0.0, 128
  %774 = vxpose.xlu0.b32.cont [13/16] 0.0, 128
  %775 = vxpose.xlu0.b32.cont [14/16] 0.0, 128
  %776 = vxpose.xlu0.b32.cont [15/16] 0.0, 128
  %777 = vxpose.xlu0.b32.end [16/16] 0.0, 128
  %v778 = vpop.trf.xlu0
  %v779 = vpop.trf.xlu0
  %v780 = vpop.trf.xlu0
  %v781 = vpop.trf.xlu0
  %v782 = vpop.trf.xlu0
  %v783 = vpop.trf.xlu0
  %v784 = vpop.trf.xlu0
  %v785 = vpop.trf.xlu0
  %v786 = vpop.trf.xlu0
  %v787 = vpop.trf.xlu0
  %v788 = vpop.trf.xlu0
  %v789 = vpop.trf.xlu0
  %v790 = vpop.trf.xlu0
  %v791 = vpop.trf.xlu0
  %v792 = vpop.trf.xlu0
  %v793 = vpop.trf.xlu0
  %vm794 = vcmask 130048
  %795 = vst.msk [vmem:[%s5] sm:$0xff] %vm794, %v778
  %796 = vst.msk [vmem:[%s5 + $0x8] sm:$0xff] %vm794, %v779
  %797 = vst.msk [vmem:[%s5 + $0x10] sm:$0xff] %vm794, %v780
  %798 = vst.msk [vmem:[%s5 + $0x18] sm:$0xff] %vm794, %v781
  %799 = vst.msk [vmem:[%s5 + $0x20] sm:$0xff] %vm794, %v782
  %800 = vst.msk [vmem:[%s5 + $0x28] sm:$0xff] %vm794, %v783
  %801 = vst.msk [vmem:[%s5 + $0x30] sm:$0xff] %vm794, %v784
  %802 = vst.msk [vmem:[%s5 + $0x38] sm:$0xff] %vm794, %v785
  %803 = vst.msk [vmem:[%s5 + $0x40] sm:$0xff] %vm794, %v786
  %804 = vst.msk [vmem:[%s5 + $0x48] sm:$0xff] %vm794, %v787
  %805 = vst.msk [vmem:[%s5 + $0x50] sm:$0xff] %vm794, %v788
  %806 = vst.msk [vmem:[%s5 + $0x58] sm:$0xff] %vm794, %v789
  %807 = vst.msk [vmem:[%s5 + $0x60] sm:$0xff] %vm794, %v790
  %808 = vst.msk [vmem:[%s5 + $0x68] sm:$0xff] %vm794, %v791
  %809 = vst.msk [vmem:[%s5 + $0x70] sm:$0xff] %vm794, %v792
  %810 = vst.msk [vmem:[%s5 + $0x78] sm:$0xff] %vm794, %v793
  %811 = vxpose.xlu0.b32.start [1/16] %v760, 128
  %812 = vxpose.xlu0.b32.cont [2/16] %v761, 128
  %813 = vxpose.xlu0.b32.cont [3/16] 0.0, 128
  %814 = vxpose.xlu0.b32.cont [4/16] 0.0, 128
  %815 = vxpose.xlu0.b32.cont [5/16] 0.0, 128
  %816 = vxpose.xlu0.b32.cont [6/16] 0.0, 128
  %817 = vxpose.xlu0.b32.cont [7/16] 0.0, 128
  %818 = vxpose.xlu0.b32.cont [8/16] 0.0, 128
  %819 = vxpose.xlu0.b32.cont [9/16] 0.0, 128
  %820 = vxpose.xlu0.b32.cont [10/16] 0.0, 128
  %821 = vxpose.xlu0.b32.cont [11/16] 0.0, 128
  %822 = vxpose.xlu0.b32.cont [12/16] 0.0, 128
  %823 = vxpose.xlu0.b32.cont [13/16] 0.0, 128
  %824 = vxpose.xlu0.b32.cont [14/16] 0.0, 128
  %825 = vxpose.xlu0.b32.cont [15/16] 0.0, 128
  %826 = vxpose.xlu0.b32.end [16/16] 0.0, 128
  %v827 = vpop.trf.xlu0
  %v828 = vpop.trf.xlu0
  %v829 = vpop.trf.xlu0
  %v830 = vpop.trf.xlu0
  %v831 = vpop.trf.xlu0
  %v832 = vpop.trf.xlu0
  %v833 = vpop.trf.xlu0
  %v834 = vpop.trf.xlu0
  %v835 = vpop.trf.xlu0
  %v836 = vpop.trf.xlu0
  %v837 = vpop.trf.xlu0
  %v838 = vpop.trf.xlu0
  %v839 = vpop.trf.xlu0
  %v840 = vpop.trf.xlu0
  %v841 = vpop.trf.xlu0
  %v842 = vpop.trf.xlu0
  %s843 = scalar_lea.vmem %s5, 128
  %844 = vst.msk [vmem:[%s843] sm:$0xff] %vm794, %v827
  %845 = vst.msk [vmem:[%s843 + $0x8] sm:$0xff] %vm794, %v828
  %846 = vst.msk [vmem:[%s843 + $0x10] sm:$0xff] %vm794, %v829
  %847 = vst.msk [vmem:[%s843 + $0x18] sm:$0xff] %vm794, %v830
  %848 = vst.msk [vmem:[%s843 + $0x20] sm:$0xff] %vm794, %v831
  %849 = vst.msk [vmem:[%s843 + $0x28] sm:$0xff] %vm794, %v832
  %850 = vst.msk [vmem:[%s843 + $0x30] sm:$0xff] %vm794, %v833
  %851 = vst.msk [vmem:[%s843 + $0x38] sm:$0xff] %vm794, %v834
  %852 = vst.msk [vmem:[%s843 + $0x40] sm:$0xff] %vm794, %v835
  %853 = vst.msk [vmem:[%s843 + $0x48] sm:$0xff] %vm794, %v836
  %854 = vst.msk [vmem:[%s843 + $0x50] sm:$0xff] %vm794, %v837
  %855 = vst.msk [vmem:[%s843 + $0x58] sm:$0xff] %vm794, %v838
  %856 = vst.msk [vmem:[%s843 + $0x60] sm:$0xff] %vm794, %v839
  %857 = vst.msk [vmem:[%s843 + $0x68] sm:$0xff] %vm794, %v840
  %858 = vst.msk [vmem:[%s843 + $0x70] sm:$0xff] %vm794, %v841
  %859 = vst.msk [vmem:[%s843 + $0x78] sm:$0xff] %vm794, %v842
  // Predicated region
  $region22: #{residual1d.1} parent=0 // pred_check
    _
  $region23: #{residual1d.1} parent=0 // pred_check_branch
    %861 = sbr.rel (0) target = $region25
  $region24: #{residual1d.1} parent=0 // pred_region
    _
  $region25: #{residual1d.1} parent=0 // pred_fallthru
    _
  // Predicated region
  $region26: #{residual1d.1} parent=0 // pred_check
    _
  $region27: #{residual1d.1} parent=0 // pred_check_branch
    %863 = sbr.rel (0) target = $region29
  $region28: #{residual1d.1} parent=0 // pred_region
    _
  $region29: #{residual1d.1} parent=0 // pred_fallthru
    _

</llo_original>
